<compile_context>
chip_gen: v7x
topology: tpu7x:2x2x1
jax: 0.10.0
libtpu: 0.0.40
codegen_flags: <defaults>
</compile_context>

<pallas_src>
import functools

import jax
import jax.numpy as jnp
from jax import lax
from jax.experimental import pallas as pl
from jax.experimental.pallas import tpu as pltpu


def _cdiv(a, b):
    return (a + b - 1) // b


def _round_up(a, b):
    return _cdiv(a, b) * b


# ----------------------------- generation-aware limits -----------------------------

@functools.lru_cache(maxsize=None)
def _chip_config():
    """Per-generation VMEM budgets and whether to split the grid for 2 TensorCores."""
    vmem = None
    try:
        info = pltpu.get_tpu_info()
        vmem = getattr(info, "vmem_capacity_bytes", None)
    except Exception:
        vmem = None
    if vmem is not None and vmem >= 100 * 1024 * 1024:
        # v5e / v6e class: 128 MiB physical VMEM, single TensorCore per chip.
        return {"tile_budget": 64 << 20, "vmem_limit": 96 << 20, "split_for_cores": False}
    # v7x class (64 MiB VMEM, 2 TCs per chip) or unknown: conservative limits.
    return {"tile_budget": 28 << 20, "vmem_limit": 40 << 20,
            "split_for_cores": vmem is not None}


# ----------------------------- Pallas kernel -----------------------------

def _gemm_bias_silu_kernel(x_ref, w_ref, b_ref, o_ref):
    # x_ref: (tm, Kp)  bf16 im2col patch tile
    # w_ref: (Kp, tn)  bf16 BN-folded weight tile (resident across the inner M loop)
    # b_ref: (1, tn)   f32  BN-folded bias (lane-dense after N padding)
    # o_ref: (tm, tn)  bf16/f32 output tile (SiLU applied, cast on store)
    z = jnp.dot(x_ref[...], w_ref[...], preferred_element_type=jnp.float32)
    z = z + b_ref[...]                                        # full-vreg VPU add
    o_ref[...] = (z * jax.nn.sigmoid(z)).astype(o_ref.dtype)  # sigmoid -> EUP slot


def _tile_bytes(tm, kp, tn, in_bytes, out_bytes):
    # Pallas double-buffers every pipelined operand; bias pads to 8 sublanes.
    return 2 * (tm * kp * in_bytes + kp * tn * in_bytes + 8 * tn * 4 + tm * tn * out_bytes)


def gemm_bias_silu(patches, w, b, *, out_dtype=jnp.float32, matmul_dtype=jnp.bfloat16):
    """Fused (M,K)@(K,N) + bias + SiLU on TPU via a single Pallas GEMM.

    `patches` is expected already in bf16 with its K axis padded to a multiple of 128
    (the im2col below produces exactly that, so no extra cast/pad round trip happens
    here); the tiny weight/bias are padded in-place. N is padded to 128 so output
    stores are unmasked lane-dense vst; accumulation and the epilogue run in f32.
    """
    M, Kin = patches.shape
    K, N = w.shape
    assert Kin >= K and b.shape == (1, N)

    cfg = _chip_config()
    Kp = _round_up(Kin, 128)
    Np = _round_up(N, 128)
    tn = 256 if Np % 256 == 0 else 128        # match 256-wide MXU on v6e/v7x when possible
    n_blocks_n = Np // tn

    in_bytes = jnp.dtype(matmul_dtype).itemsize
    out_bytes = jnp.dtype(out_dtype).itemsize

    # Row tile: as large as the generation-specific VMEM budget allows ...
    tm = 1024
    while tm > 128 and _tile_bytes(tm, Kp, tn, in_bytes, out_bytes) > cfg["tile_budget"]:
        tm //= 2
    # ... but never round M up by ~a whole oversized tile ...
    tm = min(tm, _round_up(M, 128))
    # ... and only split further for the two v7x TensorCores (never below the 256-row MXU).
    if cfg["split_for_cores"]:
        while tm > 256 and n_blocks_n * _cdiv(M, tm) < 2:
            tm //= 2
    Mp = _round_up(M, tm)

    xq = patches if patches.dtype == matmul_dtype else patches.astype(matmul_dtype)
    if (Mp, Kp) != (M, Kin):                  # no-op for the in-script call sites
        xq = jnp.pad(xq, ((0, Mp - M), (0, Kp - Kin)))
    wq = jnp.pad(w.astype(matmul_dtype), ((0, Kp - K), (0, Np - N)))
    bq = jnp.pad(b.astype(jnp.float32), ((0, 0), (0, Np - N)))

    # TODO(synk): on v5e, if profiling shows the x-tile DMA exposed, add
    # pipeline_mode=pl.Buffered(3) on the patches BlockSpec.
    out = pl.pallas_call(
        _gemm_bias_silu_kernel,
        out_shape=jax.ShapeDtypeStruct((Mp, Np), out_dtype),
        grid_spec=pltpu.PrefetchScalarGridSpec(
            num_scalar_prefetch=0,
            # N outer, M inner -> weight/bias block index constant across the inner
            # loop, so Pallas skips their re-fetch (weight stays resident in VMEM).
            grid=(n_blocks_n, Mp // tm),
            in_specs=[
                pl.BlockSpec((tm, Kp), lambda n, m: (m, 0)),
                pl.BlockSpec((Kp, tn), lambda n, m: (0, n)),
                pl.BlockSpec((1, tn), lambda n, m: (0, n)),
            ],
            out_specs=pl.BlockSpec((tm, tn), lambda n, m: (m, n)),
        ),
        compiler_params=pltpu.CompilerParams(
            dimension_semantics=("parallel", "parallel"),
            vmem_limit_bytes=cfg["vmem_limit"],
        ),
    )(xq, wq, bq)
    # Tiny slice (Np-N zero channels). Carrying the padded channels into the next GEMM
    # would 8x-inflate its im2col, so slicing here is the cheaper option.
    return out[:M, :N]


# ----------------------------- JAX glue (layout only) -----------------------------

def im2col_nhwc(x, k, s, *, k_multiple=128):
    """x: (B,H,W,C) -> patches (B*Hout*Wout, Kp), pad=k//2, patch row order [kh,kw,c].

    The K axis is padded with zeros up to a multiple of `k_multiple` directly in the
    concat, so the patches tensor is materialized exactly once (in x.dtype) with an
    MXU-friendly contraction width.  The matching weight rows are zero-padded in
    gemm_bias_silu.
    """
    assert k % 2 == 1
    B, H, W, C = x.shape
    p = k // 2
    xp = jnp.pad(x, ((0, 0), (p, p), (p, p), (0, 0)))
    Hout = (H + 2 * p - k) // s + 1
    Wout = (W + 2 * p - k) // s + 1
    cols = []
    for kh in range(k):
        for kw in range(k):
            cols.append(xp[:, kh:kh + s * (Hout - 1) + 1:s,
                              kw:kw + s * (Wout - 1) + 1:s, :])
    K = k * k * C
    Kp = _round_up(K, k_multiple)
    if Kp > K:
        cols.append(jnp.zeros((B, Hout, Wout, Kp - K), x.dtype))
    patches = jnp.concatenate(cols, axis=-1)            # (B,Hout,Wout,Kp)
    return patches.reshape(B * Hout * Wout, Kp), (B, Hout, Wout)


def _fold_bn(w_oihw, gamma, beta, mean, var, eps=1e-5):
    scale = gamma / jnp.sqrt(var + eps)                  # (Cout,)
    bias = beta - mean * scale                           # (Cout,)
    w = jnp.transpose(w_oihw, (2, 3, 1, 0)) * scale      # (k,k,Cin,Cout)
    return w, bias


def fuse_stride2_branches(params, kmax=7):
    """Combine the 1x1/3x3/5x5/7x7 stride-2 branches into one (49*Cin, 4*Cb) weight.

    All branches use pad=k//2 and stride 2, so every branch's window shares the same
    centre; a k<7 kernel equals a 7x7 kernel that is zero outside the centred kxk
    sub-window.  Concatenating along output channels reproduces torch.cat(..., dim=1).
    """
    ws, bs = [], []
    for key in ("cov1x1_2", "cov3x3_2", "cov5x5_2", "cov7x7_2"):
        w_oihw, gamma, beta, mean, var = params[key]
        k = w_oihw.shape[-1]
        w, b = _fold_bn(w_oihw, gamma, beta, mean, var)
        off = (kmax - k) // 2
        w_full = jnp.zeros((kmax, kmax) + w.shape[2:], w.dtype)
        w_full = w_full.at[off:off + k, off:off + k].set(w)
        ws.append(w_full)
        bs.append(b)
    w_cat = jnp.concatenate(ws, axis=-1)                 # (7,7,Cin,N1+N2+N3+N4)
    b_cat = jnp.concatenate(bs, axis=-1)
    cin, n = w_cat.shape[2], w_cat.shape[3]
    return w_cat.reshape(kmax * kmax * cin, n), b_cat.reshape(1, n)


def conv_bn_silu(x_nhwc, params, k, s, *, out_dtype=jnp.float32):
    """One Conv block: Conv2d(k, s, pad=k//2, bias=False) + folded BN + SiLU."""
    w_oihw = params[0]
    cout = w_oihw.shape[0]
    w, bias = _fold_bn(*params)
    patches, (B, Hout, Wout) = im2col_nhwc(x_nhwc, k, s)
    y = gemm_bias_silu(patches, w.reshape(-1, cout), bias.reshape(1, cout),
                       out_dtype=out_dtype)
    return y.reshape(B, Hout, Wout, cout)


def multi_kernel_conv(x_nchw, params, *, matmul_dtype=jnp.bfloat16):
    """Forward pass of MultiKernelConv. Input NCHW, output NCHW f32 (like PyTorch)."""
    # NCHW -> NHWC and cast to bf16 BEFORE im2col (cast C channels, not 49*C).
    x = jnp.transpose(x_nchw, (0, 2, 3, 1)).astype(matmul_dtype)
    # All four stride-2 branches: single k=7 bf16 im2col + one fused GEMM.
    w_fused, b_fused = fuse_stride2_branches(params)
    patches, (B, Hout, Wout) = im2col_nhwc(x, 7, 2)
    # Intermediate stays bf16 — it only feeds the next bf16 GEMM (halves writeback).
    mid = gemm_bias_silu(patches, w_fused, b_fused, out_dtype=matmul_dtype)
    mid = mid.reshape(B, Hout, Wout, -1)                  # channel order == torch.cat
    # TODO(synk): fuse the final 3x3 stride-1 conv into the same pallas_call (consume
    # `mid` from VMEM with halo handling / in-kernel im2col) instead of a second
    # XLA im2col round trip through HBM.
    out = conv_bn_silu(mid, params["cov3x3_1"], k=3, s=1, out_dtype=jnp.float32)
    return jnp.transpose(out, (0, 3, 1, 2))               # NHWC -> NCHW


# ----------------------------- reference (plain XLA, for validation) -----------------------------

def _ref_conv_bn_silu(x_nhwc, params, k, s, eps=1e-5):
    w_oihw, gamma, beta, mean, var = params
    w_hwio = jnp.transpose(w_oihw, (2, 3, 1, 0))
    p = k // 2
    y = lax.conv_general_dilated(x_nhwc, w_hwio, (s, s), [(p, p), (p, p)],
                                 dimension_numbers=("NHWC", "HWIO", "NHWC"))
    scale = gamma / jnp.sqrt(var + eps)
    y = y * scale + (beta - mean * scale)
    return y * jax.nn.sigmoid(y)


def multi_kernel_conv_ref(x_nchw, params):
    x = jnp.transpose(x_nchw, (0, 2, 3, 1))
    rs = [_ref_conv_bn_silu(x, params[name], k, 2)
          for name, k in (("cov1x1_2", 1), ("cov3x3_2", 3), ("cov5x5_2", 5), ("cov7x7_2", 7))]
    cat = jnp.concatenate(rs, axis=-1)
    out = _ref_conv_bn_silu(cat, params["cov3x3_1"], 3, 1)
    return jnp.transpose(out, (0, 3, 1, 2))


# ----------------------------- params / main -----------------------------

def init_conv_params(key, cin, cout, k):
    kw, kg, kb, km, kv = jax.random.split(key, 5)
    w = 0.1 * jax.random.normal(kw, (cout, cin, k, k), jnp.float32)
    gamma = 1.0 + 0.1 * jax.random.normal(kg, (cout,), jnp.float32)
    beta = 0.05 * jax.random.normal(kb, (cout,), jnp.float32)
    mean = 0.05 * jax.random.normal(km, (cout,), jnp.float32)
    var = jnp.abs(jax.random.normal(kv, (cout,), jnp.float32)) + 0.5
    return (w, gamma, beta, mean, var)


if __name__ == "__main__":
    c1, c2 = 4, 32
    B, H, W = 2, 16, 16

    root = jax.random.PRNGKey(0)
    kx, k1, k2, k3, k4, k5 = jax.random.split(root, 6)

    params = {
        "cov1x1_2": init_conv_params(k1, c1, c2 // 8, 1),
        "cov3x3_2": init_conv_params(k2, c1, c2 // 8, 3),
        "cov5x5_2": init_conv_params(k3, c1, c2 // 8, 5),
        "cov7x7_2": init_conv_params(k4, c1, c2 // 8, 7),
        "cov3x3_1": init_conv_params(k5, c2 // 2, c2, 3),
    }

    x = jax.random.normal(kx, (B, c1, H, W), jnp.float32)   # NCHW like PyTorch

    fwd = jax.jit(functools.partial(multi_kernel_conv, params=params))
    y = fwd(x)
    jax.block_until_ready(y)
    assert y.shape == (B, c2, H // 2, W // 2), y.shape

    # Validate branch fusion / BN folding / bf16 intermediate against an f32 XLA
    # reference.  0.1 ≈ 5 sigma of the expected two-stage bf16 rounding error at these
    # activation magnitudes (tightened from the previous 0.25).
    y_ref = jax.jit(functools.partial(multi_kernel_conv_ref, params=params))(x)
    err = float(jnp.max(jnp.abs(y - y_ref)))
    assert err < 0.1, f"max abs err vs reference: {err}"

    print("KERNEL_OK")
</pallas_src>

<mosaic_0001>
module attributes {stable_mosaic.version = 11 : i64} {
  func.func @_gemm_bias_silu_kernel(%arg0: i32, %arg1: i32, %arg2: memref<128x256xbf16, #tpu.memory_space<vmem>>, %arg3: memref<256x128xbf16, #tpu.memory_space<vmem>>, %arg4: memref<1x128xf32, #tpu.memory_space<vmem>>, %arg5: memref<128x128xbf16, #tpu.memory_space<vmem>>) attributes {dimension_semantics = [#tpu.dimension_semantics<parallel>, #tpu.dimension_semantics<parallel>], iteration_bounds = array<i64: 1, 1>, scalar_prefetch = 0 : i64, scratch_operands = 0 : i64, tpu.core_type = #tpu.core_type<tc>, window_params = [{transform_indices = @transform_0, window_bounds = array<i64: 128, 256>}, {transform_indices = @transform_1, window_bounds = array<i64: 256, 128>}, {transform_indices = @transform_2, window_bounds = array<i64: 1, 128>}, {transform_indices = @transform_3, window_bounds = array<i64: 128, 128>}]} {
    %c0 = arith.constant 0 : index
    %c0_0 = arith.constant 0 : index
    %0 = vector.load %arg2[%c0, %c0_0] : memref<128x256xbf16, #tpu.memory_space<vmem>>, vector<128x256xbf16>
    %c0_1 = arith.constant 0 : index
    %c0_2 = arith.constant 0 : index
    %1 = vector.load %arg3[%c0_1, %c0_2] : memref<256x128xbf16, #tpu.memory_space<vmem>>, vector<256x128xbf16>
    %cst = arith.constant dense<0.000000e+00> : vector<128x128xf32>
    %2 = tpu.matmul %0, %1, %cst {dimension_numbers = #tpu.dot_dimension_numbers<[1], [0], [0], [1], [0, 0, 1, 1], [], []>} : vector<128x256xbf16>, vector<256x128xbf16>, vector<128x128xf32> -> vector<128x128xf32>
    %c0_3 = arith.constant 0 : index
    %c0_4 = arith.constant 0 : index
    %3 = vector.load %arg4[%c0_3, %c0_4] : memref<1x128xf32, #tpu.memory_space<vmem>>, vector<1x128xf32>
    %4 = vector.broadcast %3 : vector<1x128xf32> to vector<128x128xf32>
    %5 = arith.addf %2, %4 : vector<128x128xf32>
    %6 = arith.negf %5 : vector<128x128xf32>
    %7 = math.exp %6 : vector<128x128xf32>
    %cst_5 = arith.constant 1.000000e+00 : f32
    %8 = vector.broadcast %cst_5 : f32 to vector<128x128xf32>
    %9 = arith.addf %8, %7 : vector<128x128xf32>
    %10 = arith.divf %8, %9 : vector<128x128xf32>
    %11 = arith.mulf %5, %10 : vector<128x128xf32>
    %12 = arith.truncf %11 : vector<128x128xf32> to vector<128x128xbf16>
    %c0_6 = arith.constant 0 : index
    %c0_7 = arith.constant 0 : index
    %13 = vector.load %arg5[%c0_6, %c0_7] : memref<128x128xbf16, #tpu.memory_space<vmem>>, vector<128x128xbf16>
    tpu.vector_store %arg5[%c0_6, %c0_7], %12 {strides = array<i32>} : memref<128x128xbf16, #tpu.memory_space<vmem>>, vector<128x128xbf16>,
    return
  }
  func.func @transform_0(%arg0: i32, %arg1: i32) -> (i32, i32) {
    %c0_i32 = arith.constant 0 : i32
    %c0_i32_0 = arith.constant 0 : i32
    return %arg1, %c0_i32 : i32, i32
  }
  func.func @transform_1(%arg0: i32, %arg1: i32) -> (i32, i32) {
    %c0_i32 = arith.constant 0 : i32
    %c0_i32_0 = arith.constant 0 : i32
    return %c0_i32, %arg0 : i32, i32
  }
  func.func @transform_2(%arg0: i32, %arg1: i32) -> (i32, i32) {
    %c0_i32 = arith.constant 0 : i32
    %c0_i32_0 = arith.constant 0 : i32
    return %c0_i32, %arg0 : i32, i32
  }
  func.func @transform_3(%arg0: i32, %arg1: i32) -> (i32, i32) {
    %c0_i32 = arith.constant 0 : i32
    return %arg1, %arg0 : i32, i32
  }
}

module attributes {stable_mosaic.version = 11 : i64} {
  func.func @_gemm_bias_silu_kernel(%arg0: i32, %arg1: i32, %arg2: memref<128x256xbf16, #tpu.memory_space<vmem>>, %arg3: memref<256x128xbf16, #tpu.memory_space<vmem>>, %arg4: memref<1x128xf32, #tpu.memory_space<vmem>>, %arg5: memref<128x128xf32, #tpu.memory_space<vmem>>) attributes {dimension_semantics = [#tpu.dimension_semantics<parallel>, #tpu.dimension_semantics<parallel>], iteration_bounds = array<i64: 1, 1>, scalar_prefetch = 0 : i64, scratch_operands = 0 : i64, tpu.core_type = #tpu.core_type<tc>, window_params = [{transform_indices = @transform_0, window_bounds = array<i64: 128, 256>}, {transform_indices = @transform_1, window_bounds = array<i64: 256, 128>}, {transform_indices = @transform_2, window_bounds = array<i64: 1, 128>}, {transform_indices = @transform_3, window_bounds = array<i64: 128, 128>}]} {
    %c0 = arith.constant 0 : index
    %c0_0 = arith.constant 0 : index
    %0 = vector.load %arg2[%c0, %c0_0] : memref<128x256xbf16, #tpu.memory_space<vmem>>, vector<128x256xbf16>
    %c0_1 = arith.constant 0 : index
    %c0_2 = arith.constant 0 : index
    %1 = vector.load %arg3[%c0_1, %c0_2] : memref<256x128xbf16, #tpu.memory_space<vmem>>, vector<256x128xbf16>
    %cst = arith.constant dense<0.000000e+00> : vector<128x128xf32>
    %2 = tpu.matmul %0, %1, %cst {dimension_numbers = #tpu.dot_dimension_numbers<[1], [0], [0], [1], [0, 0, 1, 1], [], []>} : vector<128x256xbf16>, vector<256x128xbf16>, vector<128x128xf32> -> vector<128x128xf32>
    %c0_3 = arith.constant 0 : index
    %c0_4 = arith.constant 0 : index
    %3 = vector.load %arg4[%c0_3, %c0_4] : memref<1x128xf32, #tpu.memory_space<vmem>>, vector<1x128xf32>
    %4 = vector.broadcast %3 : vector<1x128xf32> to vector<128x128xf32>
    %5 = arith.addf %2, %4 : vector<128x128xf32>
    %6 = arith.negf %5 : vector<128x128xf32>
    %7 = math.exp %6 : vector<128x128xf32>
    %cst_5 = arith.constant 1.000000e+00 : f32
    %8 = vector.broadcast %cst_5 : f32 to vector<128x128xf32>
    %9 = arith.addf %8, %7 : vector<128x128xf32>
    %10 = arith.divf %8, %9 : vector<128x128xf32>
    %11 = arith.mulf %5, %10 : vector<128x128xf32>
    %c0_6 = arith.constant 0 : index
    %c0_7 = arith.constant 0 : index
    %12 = vector.load %arg5[%c0_6, %c0_7] : memref<128x128xf32, #tpu.memory_space<vmem>>, vector<128x128xf32>
    tpu.vector_store %arg5[%c0_6, %c0_7], %11 {strides = array<i32>} : memref<128x128xf32, #tpu.memory_space<vmem>>, vector<128x128xf32>,
    return
  }
  func.func @transform_0(%arg0: i32, %arg1: i32) -> (i32, i32) {
    %c0_i32 = arith.constant 0 : i32
    %c0_i32_0 = arith.constant 0 : i32
    return %arg1, %c0_i32 : i32, i32
  }
  func.func @transform_1(%arg0: i32, %arg1: i32) -> (i32, i32) {
    %c0_i32 = arith.constant 0 : i32
    %c0_i32_0 = arith.constant 0 : i32
    return %c0_i32, %arg0 : i32, i32
  }
  func.func @transform_2(%arg0: i32, %arg1: i32) -> (i32, i32) {
    %c0_i32 = arith.constant 0 : i32
    %c0_i32_0 = arith.constant 0 : i32
    return %c0_i32, %arg0 : i32, i32
  }
  func.func @transform_3(%arg0: i32, %arg1: i32) -> (i32, i32) {
    %c0_i32 = arith.constant 0 : i32
    return %arg1, %arg0 : i32, i32
  }
}

</mosaic_0001>

<llo_original>
// kernel: multi_kernel_conv.3
$region0: #{multi_kernel_conv.3}
  #allocation0 [shape = 'u32[]', space=smem, size = 0x4, offset = 0x4, fixed_abs, tag = 'smem constant byte address 0x4 - core index']
  #allocation1 [shape = 'u32[144,128]{1,0:T(1,128)}', space=vmem, size = 0x12000, scoped, tag = 'internal scratch']
  %s0 = inlined_call_operand.vmem [shape: bf16[128,256], index: 0, kind: input, shape index: {}]
  %s1 = inlined_call_operand.vmem [shape: bf16[256,128], index: 1, kind: input, shape index: {}]
  %s2 = inlined_call_operand.vmem [shape: f32[1,128], index: 2, kind: input, shape index: {}]
  %s3 = inlined_call_operand.hbm [shape: f32[128,128], index: 3, kind: output, shape index: {}]
  %s4 = sld [smem:[#allocation0]]
  $region22: #{multi_kernel_conv.3} parent=0
    _
  %s6 = ssub.s32 1, %s4
  %s7 = scalar_select 0, %s6, %s4
  $region1: #{multi_kernel_conv.3} parent=0
    #allocation2 [shape = 'u8[65536]{0}', space=vmem, size = 0x10000, scoped, tag = 'output window, operand 0, single buffered']
    #allocation3 [shape = 's32[1]{0}', space=sflag, size = 0x4, scoped, tag = 'scoped memory for multi_kernel_conv.3']
    %8 = vsyncpa [#allocation3], 0
    // Predicated region
    $region2: #{multi_kernel_conv.3} parent=1 // pred_check
      _
    $region3: #{multi_kernel_conv.3} parent=1 // pred_check_branch
      %10 = sbr.rel (0) target = $region5
    $region4: #{multi_kernel_conv.3} parent=1 // pred_region
      _
    $region5: #{multi_kernel_conv.3} parent=1 // pred_fallthru
      _
    // Predicated region
    $region6: #{multi_kernel_conv.3} parent=1 // pred_check
      _
    $region7: #{multi_kernel_conv.3} parent=1 // pred_check_branch
      %12 = sbr.rel (0) target = $region9
    $region8: #{multi_kernel_conv.3} parent=1 // pred_region
      _
    $region9: #{multi_kernel_conv.3} parent=1 // pred_fallthru
      _
    // Predicated region
    $region10: #{multi_kernel_conv.3} parent=1 // pred_check
      _
    $region11: #{multi_kernel_conv.3} parent=1 // pred_check_branch
      %14 = sbr.rel (0) target = $region13
    $region12: #{multi_kernel_conv.3} parent=1 // pred_region
      _
    $region13: #{multi_kernel_conv.3} parent=1 // pred_fallthru
      _
    %v16 = vld [vmem:[%s0] sm:$0xff]
    %v17 = vld [vmem:[%s0 + $0x8] sm:$0xff]
    %v18 = vld [vmem:[%s0 + $0x10] sm:$0xff]
    %v19 = vld [vmem:[%s0 + $0x18] sm:$0xff]
    %v20 = vld [vmem:[%s0 + $0x20] sm:$0xff]
    %v21 = vld [vmem:[%s0 + $0x28] sm:$0xff]
    %v22 = vld [vmem:[%s0 + $0x30] sm:$0xff]
    %v23 = vld [vmem:[%s0 + $0x38] sm:$0xff]
    %v24 = vld [vmem:[%s0 + $0x40] sm:$0xff]
    %v25 = vld [vmem:[%s0 + $0x48] sm:$0xff]
    %v26 = vld [vmem:[%s0 + $0x50] sm:$0xff]
    %v27 = vld [vmem:[%s0 + $0x58] sm:$0xff]
    %v28 = vld [vmem:[%s0 + $0x60] sm:$0xff]
    %v29 = vld [vmem:[%s0 + $0x68] sm:$0xff]
    %v30 = vld [vmem:[%s0 + $0x70] sm:$0xff]
    %v31 = vld [vmem:[%s0 + $0x78] sm:$0xff]
    %v32 = vld [vmem:[%s1] sm:$0xf]
    %v33 = vld [vmem:[%s1 + $0x4] sm:$0xf]
    %v34 = vld [vmem:[%s1 + $0x8] sm:$0xf]
    %v35 = vld [vmem:[%s1 + $0xc] sm:$0xf]
    %v36 = vld [vmem:[%s1 + $0x10] sm:$0xf]
    %v37 = vld [vmem:[%s1 + $0x14] sm:$0xf]
    %v38 = vld [vmem:[%s1 + $0x18] sm:$0xf]
    %v39 = vld [vmem:[%s1 + $0x1c] sm:$0xf]
    %v40 = vld [vmem:[%s1 + $0x20] sm:$0xf]
    %v41 = vld [vmem:[%s1 + $0x24] sm:$0xf]
    %v42 = vld [vmem:[%s1 + $0x28] sm:$0xf]
    %v43 = vld [vmem:[%s1 + $0x2c] sm:$0xf]
    %v44 = vld [vmem:[%s1 + $0x30] sm:$0xf]
    %v45 = vld [vmem:[%s1 + $0x34] sm:$0xf]
    %v46 = vld [vmem:[%s1 + $0x38] sm:$0xf]
    %v47 = vld [vmem:[%s1 + $0x3c] sm:$0xf]
    %v48 = vld [vmem:[%s1 + $0x40] sm:$0xf]
    %v49 = vld [vmem:[%s1 + $0x44] sm:$0xf]
    %v50 = vld [vmem:[%s1 + $0x48] sm:$0xf]
    %v51 = vld [vmem:[%s1 + $0x4c] sm:$0xf]
    %v52 = vld [vmem:[%s1 + $0x50] sm:$0xf]
    %v53 = vld [vmem:[%s1 + $0x54] sm:$0xf]
    %v54 = vld [vmem:[%s1 + $0x58] sm:$0xf]
    %v55 = vld [vmem:[%s1 + $0x5c] sm:$0xf]
    %v56 = vld [vmem:[%s1 + $0x60] sm:$0xf]
    %v57 = vld [vmem:[%s1 + $0x64] sm:$0xf]
    %v58 = vld [vmem:[%s1 + $0x68] sm:$0xf]
    %v59 = vld [vmem:[%s1 + $0x6c] sm:$0xf]
    %v60 = vld [vmem:[%s1 + $0x70] sm:$0xf]
    %v61 = vld [vmem:[%s1 + $0x74] sm:$0xf]
    %v62 = vld [vmem:[%s1 + $0x78] sm:$0xf]
    %v63 = vld [vmem:[%s1 + $0x7c] sm:$0xf]
    %v64 = vld [vmem:[%s2] sm:$0x1]
    %v66 = vlaneseq
    %v67 = vshrl.u32 %v66, 7
    %v68 = vsub.s32 0, %v67
    %v69 = vrot.slane %v64, %v68
    %v87 = vunpack.c.l.b16 %v16
    %v88 = vunpack.c.h.b16 %v16
    %v89 = vunpack.c.l.b16 %v17
    %v90 = vunpack.c.h.b16 %v17
    %v91 = vunpack.c.l.b16 %v18
    %v92 = vunpack.c.h.b16 %v18
    %v93 = vunpack.c.l.b16 %v19
    %v94 = vunpack.c.h.b16 %v19
    %v95 = vunpack.c.l.b16 %v20
    %v96 = vunpack.c.h.b16 %v20
    %v97 = vunpack.c.l.b16 %v21
    %v98 = vunpack.c.h.b16 %v21
    %v99 = vunpack.c.l.b16 %v22
    %v100 = vunpack.c.h.b16 %v22
    %v101 = vunpack.c.l.b16 %v23
    %v102 = vunpack.c.h.b16 %v23
    %v103 = vunpack.c.l.b16 %v24
    %v104 = vunpack.c.h.b16 %v24
    %v105 = vunpack.c.l.b16 %v25
    %v106 = vunpack.c.h.b16 %v25
    %v107 = vunpack.c.l.b16 %v26
    %v108 = vunpack.c.h.b16 %v26
    %v109 = vunpack.c.l.b16 %v27
    %v110 = vunpack.c.h.b16 %v27
    %v111 = vunpack.c.l.b16 %v28
    %v112 = vunpack.c.h.b16 %v28
    %v113 = vunpack.c.l.b16 %v29
    %v114 = vunpack.c.h.b16 %v29
    %v115 = vunpack.c.l.b16 %v30
    %v116 = vunpack.c.h.b16 %v30
    %v117 = vunpack.c.l.b16 %v31
    %v118 = vunpack.c.h.b16 %v31
    %v119 = vpack.c.b16 %v89, %v87
    %v120 = vpack.c.b16 %v90, %v88
    %v121 = vpack.c.b16 %v93, %v91
    %v122 = vpack.c.b16 %v94, %v92
    %v123 = vpack.c.b16 %v97, %v95
    %v124 = vpack.c.b16 %v98, %v96
    %v125 = vpack.c.b16 %v101, %v99
    %v126 = vpack.c.b16 %v102, %v100
    %v127 = vpack.c.b16 %v105, %v103
    %v128 = vpack.c.b16 %v106, %v104
    %v129 = vpack.c.b16 %v109, %v107
    %v130 = vpack.c.b16 %v110, %v108
    %v131 = vpack.c.b16 %v113, %v111
    %v132 = vpack.c.b16 %v114, %v112
    %v133 = vpack.c.b16 %v117, %v115
    %v134 = vpack.c.b16 %v118, %v116
    %v183 = vunpack.c.l.b16 %v32
    %v184 = vunpack.c.l.b16 %v33
    %v185 = vunpack.c.l.b16 %v34
    %v186 = vunpack.c.l.b16 %v35
    %v187 = vunpack.c.l.b16 %v36
    %v188 = vunpack.c.l.b16 %v37
    %v189 = vunpack.c.l.b16 %v38
    %v190 = vunpack.c.l.b16 %v39
    %v191 = vunpack.c.l.b16 %v40
    %v192 = vunpack.c.l.b16 %v41
    %v193 = vunpack.c.l.b16 %v42
    %v194 = vunpack.c.l.b16 %v43
    %v195 = vunpack.c.l.b16 %v44
    %v196 = vunpack.c.l.b16 %v45
    %v197 = vunpack.c.l.b16 %v46
    %v198 = vunpack.c.l.b16 %v47
    %v199 = vunpack.c.l.b16 %v48
    %v200 = vunpack.c.l.b16 %v49
    %v201 = vunpack.c.l.b16 %v50
    %v202 = vunpack.c.l.b16 %v51
    %v203 = vunpack.c.l.b16 %v52
    %v204 = vunpack.c.l.b16 %v53
    %v205 = vunpack.c.l.b16 %v54
    %v206 = vunpack.c.l.b16 %v55
    %v207 = vunpack.c.l.b16 %v56
    %v208 = vunpack.c.l.b16 %v57
    %v209 = vunpack.c.l.b16 %v58
    %v210 = vunpack.c.l.b16 %v59
    %v211 = vunpack.c.l.b16 %v60
    %v212 = vunpack.c.l.b16 %v61
    %v213 = vunpack.c.l.b16 %v62
    %v214 = vunpack.c.l.b16 %v63
    %v215 = vpack.c.b16 %v184, %v183
    %v216 = vpack.c.b16 %v186, %v185
    %v217 = vpack.c.b16 %v188, %v187
    %v218 = vpack.c.b16 %v190, %v189
    %v219 = vpack.c.b16 %v192, %v191
    %v220 = vpack.c.b16 %v194, %v193
    %v221 = vpack.c.b16 %v196, %v195
    %v222 = vpack.c.b16 %v198, %v197
    %v223 = vpack.c.b16 %v200, %v199
    %v224 = vpack.c.b16 %v202, %v201
    %v225 = vpack.c.b16 %v204, %v203
    %v226 = vpack.c.b16 %v206, %v205
    %v227 = vpack.c.b16 %v208, %v207
    %v228 = vpack.c.b16 %v210, %v209
    %v229 = vpack.c.b16 %v212, %v211
    %v230 = vpack.c.b16 %v214, %v213
    %247 = vmatprep.subr.bf16.mxu0 0
    %248 = vmatpush1.bf16.msra.mxu0 %v215
    %249 = vmatprep.subr.bf16.mxu0 0
    %250 = vmatpush1.bf16.msra.mxu0 %v216
    %251 = vmatprep.subr.bf16.mxu0 0
    %252 = vmatpush1.bf16.msra.mxu0 %v217
    %253 = vmatprep.subr.bf16.mxu0 0
    %254 = vmatpush1.bf16.msra.mxu0 %v218
    %255 = vmatprep.subr.bf16.mxu0 0
    %256 = vmatpush1.bf16.msra.mxu0 %v219
    %257 = vmatprep.subr.bf16.mxu0 0
    %258 = vmatpush1.bf16.msra.mxu0 %v220
    %259 = vmatprep.subr.bf16.mxu0 0
    %260 = vmatpush1.bf16.msra.mxu0 %v221
    %261 = vmatprep.subr.bf16.mxu0 0
    %262 = vmatpush1.bf16.msra.mxu0 %v222
    %263 = vmatprep.subr.bf16.mxu0 0
    %264 = vmatpush1.bf16.msra.mxu0 %v223
    %265 = vmatprep.subr.bf16.mxu0 0
    %266 = vmatpush1.bf16.msra.mxu0 %v224
    %267 = vmatprep.subr.bf16.mxu0 0
    %268 = vmatpush1.bf16.msra.mxu0 %v225
    %269 = vmatprep.subr.bf16.mxu0 0
    %270 = vmatpush1.bf16.msra.mxu0 %v226
    %271 = vmatprep.subr.bf16.mxu0 0
    %272 = vmatpush1.bf16.msra.mxu0 %v227
    %273 = vmatprep.subr.bf16.mxu0 0
    %274 = vmatpush1.bf16.msra.mxu0 %v228
    %275 = vmatprep.subr.bf16.mxu0 0
    %276 = vmatpush1.bf16.msra.mxu0 %v229
    %277 = vmatprep.subr.bf16.mxu0 0
    %278 = vmatpush1.bf16.msra.mxu0 %v230
    %279 = vmatprep.mubr.bf16.mxu0 %v120
    %280 = vmatmul.mubr.bf16.gmra.mrb[0].mxu0 %v119
    %v281 = vpop.f32.mrb[0].mxu0
    %v282 = vadd.f32 %v69, %v281
    %v283 = vpop.f32.mrb[0].mxu0
    %v284 = vpop.f32.mrb[0].mxu0
    %v285 = vadd.f32 %v69, %v284
    %v286 = vpop.f32.mrb[0].mxu0
    %287 = vmatprep.mubr.bf16.mxu0 %v122
    %288 = vmatmul.mubr.bf16.gmra.mrb[0].mxu0 %v121
    %v289 = vpop.f32.mrb[0].mxu0
    %v290 = vadd.f32 %v69, %v289
    %v291 = vpop.f32.mrb[0].mxu0
    %v292 = vpop.f32.mrb[0].mxu0
    %v293 = vadd.f32 %v69, %v292
    %v294 = vpop.f32.mrb[0].mxu0
    %295 = vmatprep.mubr.bf16.mxu0 %v124
    %296 = vmatmul.mubr.bf16.gmra.mrb[0].mxu0 %v123
    %v297 = vpop.f32.mrb[0].mxu0
    %v298 = vadd.f32 %v69, %v297
    %v299 = vpop.f32.mrb[0].mxu0
    %v300 = vpop.f32.mrb[0].mxu0
    %v301 = vadd.f32 %v69, %v300
    %v302 = vpop.f32.mrb[0].mxu0
    %303 = vmatprep.mubr.bf16.mxu0 %v126
    %304 = vmatmul.mubr.bf16.gmra.mrb[0].mxu0 %v125
    %v305 = vpop.f32.mrb[0].mxu0
    %v306 = vadd.f32 %v69, %v305
    %v307 = vpop.f32.mrb[0].mxu0
    %v308 = vpop.f32.mrb[0].mxu0
    %v309 = vadd.f32 %v69, %v308
    %v310 = vpop.f32.mrb[0].mxu0
    %311 = vmatprep.mubr.bf16.mxu0 %v128
    %312 = vmatmul.mubr.bf16.gmra.mrb[0].mxu0 %v127
    %v313 = vpop.f32.mrb[0].mxu0
    %v314 = vadd.f32 %v69, %v313
    %v315 = vpop.f32.mrb[0].mxu0
    %v316 = vpop.f32.mrb[0].mxu0
    %v317 = vadd.f32 %v69, %v316
    %v318 = vpop.f32.mrb[0].mxu0
    %319 = vmatprep.mubr.bf16.mxu0 %v130
    %320 = vmatmul.mubr.bf16.gmra.mrb[0].mxu0 %v129
    %v321 = vpop.f32.mrb[0].mxu0
    %v322 = vadd.f32 %v69, %v321
    %v323 = vpop.f32.mrb[0].mxu0
    %v324 = vpop.f32.mrb[0].mxu0
    %v325 = vadd.f32 %v69, %v324
    %v326 = vpop.f32.mrb[0].mxu0
    %327 = vmatprep.mubr.bf16.mxu0 %v132
    %328 = vmatmul.mubr.bf16.gmra.mrb[0].mxu0 %v131
    %v329 = vpop.f32.mrb[0].mxu0
    %v330 = vadd.f32 %v69, %v329
    %v331 = vpop.f32.mrb[0].mxu0
    %v332 = vpop.f32.mrb[0].mxu0
    %v333 = vadd.f32 %v69, %v332
    %v334 = vpop.f32.mrb[0].mxu0
    %335 = vmatprep.mubr.bf16.mxu0 %v134
    %336 = vmatmul.mubr.bf16.gmra.mrb[0].mxu0 %v133
    %v337 = vpop.f32.mrb[0].mxu0
    %v338 = vadd.f32 %v69, %v337
    %v339 = vpop.f32.mrb[0].mxu0
    %v340 = vpop.f32.mrb[0].mxu0
    %v341 = vadd.f32 %v69, %v340
    %v342 = vpop.f32.mrb[0].mxu0
    %343 = vdwg.mxu0
    %v344 = vxor.u32 %v282, 2147483648
    %v345 = vxor.u32 %v285, 2147483648
    %v346 = vxor.u32 %v290, 2147483648
    %v347 = vxor.u32 %v293, 2147483648
    %v348 = vxor.u32 %v298, 2147483648
    %v349 = vxor.u32 %v301, 2147483648
    %v350 = vxor.u32 %v306, 2147483648
    %v351 = vxor.u32 %v309, 2147483648
    %v352 = vxor.u32 %v314, 2147483648
    %v353 = vxor.u32 %v317, 2147483648
    %v354 = vxor.u32 %v322, 2147483648
    %v355 = vxor.u32 %v325, 2147483648
    %v356 = vxor.u32 %v330, 2147483648
    %v357 = vxor.u32 %v333, 2147483648
    %v358 = vxor.u32 %v338, 2147483648
    %v359 = vxor.u32 %v341, 2147483648
    %v360 = vmul.f32 %v344, 1.442695
    %v361 = vpow.pop %v360
    %v362 = vmul.f32 %v345, 1.442695
    %v363 = vpow.pop %v362
    %v364 = vmul.f32 %v346, 1.442695
    %v365 = vpow.pop %v364
    %v366 = vmul.f32 %v347, 1.442695
    %v367 = vpow.pop %v366
    %v368 = vmul.f32 %v348, 1.442695
    %v369 = vpow.pop %v368
    %v370 = vmul.f32 %v349, 1.442695
    %v371 = vpow.pop %v370
    %v372 = vmul.f32 %v350, 1.442695
    %v373 = vpow.pop %v372
    %v374 = vmul.f32 %v351, 1.442695
    %v375 = vpow.pop %v374
    %v376 = vmul.f32 %v352, 1.442695
    %v377 = vpow.pop %v376
    %v378 = vmul.f32 %v353, 1.442695
    %v379 = vpow.pop %v378
    %v380 = vmul.f32 %v354, 1.442695
    %v381 = vpow.pop %v380
    %v382 = vmul.f32 %v355, 1.442695
    %v383 = vpow.pop %v382
    %v384 = vmul.f32 %v356, 1.442695
    %v385 = vpow.pop %v384
    %v386 = vmul.f32 %v357, 1.442695
    %v387 = vpow.pop %v386
    %v388 = vmul.f32 %v358, 1.442695
    %v389 = vpow.pop %v388
    %v390 = vmul.f32 %v359, 1.442695
    %v391 = vpow.pop %v390
    %v392 = vadd.f32 %v361, 1.0
    %v393 = vadd.f32 %v363, 1.0
    %v394 = vadd.f32 %v365, 1.0
    %v395 = vadd.f32 %v367, 1.0
    %v396 = vadd.f32 %v369, 1.0
    %v397 = vadd.f32 %v371, 1.0
    %v398 = vadd.f32 %v373, 1.0
    %v399 = vadd.f32 %v375, 1.0
    %v400 = vadd.f32 %v377, 1.0
    %v401 = vadd.f32 %v379, 1.0
    %v402 = vadd.f32 %v381, 1.0
    %v403 = vadd.f32 %v383, 1.0
    %v404 = vadd.f32 %v385, 1.0
    %v405 = vadd.f32 %v387, 1.0
    %v406 = vadd.f32 %v389, 1.0
    %v407 = vadd.f32 %v391, 1.0
    %v408 = vrcp.pop %v392
    %v409 = vmul.f32 1.0, %v408
    %v410 = vrcp.pop %v393
    %v411 = vmul.f32 1.0, %v410
    %v412 = vrcp.pop %v394
    %v413 = vmul.f32 1.0, %v412
    %v414 = vrcp.pop %v395
    %v415 = vmul.f32 1.0, %v414
    %v416 = vrcp.pop %v396
    %v417 = vmul.f32 1.0, %v416
    %v418 = vrcp.pop %v397
    %v419 = vmul.f32 1.0, %v418
    %v420 = vrcp.pop %v398
    %v421 = vmul.f32 1.0, %v420
    %v422 = vrcp.pop %v399
    %v423 = vmul.f32 1.0, %v422
    %v424 = vrcp.pop %v400
    %v425 = vmul.f32 1.0, %v424
    %v426 = vrcp.pop %v401
    %v427 = vmul.f32 1.0, %v426
    %v428 = vrcp.pop %v402
    %v429 = vmul.f32 1.0, %v428
    %v430 = vrcp.pop %v403
    %v431 = vmul.f32 1.0, %v430
    %v432 = vrcp.pop %v404
    %v433 = vmul.f32 1.0, %v432
    %v434 = vrcp.pop %v405
    %v435 = vmul.f32 1.0, %v434
    %v436 = vrcp.pop %v406
    %v437 = vmul.f32 1.0, %v436
    %v438 = vrcp.pop %v407
    %v439 = vmul.f32 1.0, %v438
    %v440 = vmul.f32 %v282, %v409
    %v441 = vmul.f32 %v285, %v411
    %v442 = vmul.f32 %v290, %v413
    %v443 = vmul.f32 %v293, %v415
    %v444 = vmul.f32 %v298, %v417
    %v445 = vmul.f32 %v301, %v419
    %v446 = vmul.f32 %v306, %v421
    %v447 = vmul.f32 %v309, %v423
    %v448 = vmul.f32 %v314, %v425
    %v449 = vmul.f32 %v317, %v427
    %v450 = vmul.f32 %v322, %v429
    %v451 = vmul.f32 %v325, %v431
    %v452 = vmul.f32 %v330, %v433
    %v453 = vmul.f32 %v333, %v435
    %v454 = vmul.f32 %v338, %v437
    %v455 = vmul.f32 %v341, %v439
    %456 = vst [vmem:[#allocation2] sm:$0xff] %v440
    %457 = vst [vmem:[#allocation2 + $0x8] sm:$0xff] %v441
    %458 = vst [vmem:[#allocation2 + $0x10] sm:$0xff] %v442
    %459 = vst [vmem:[#allocation2 + $0x18] sm:$0xff] %v443
    %460 = vst [vmem:[#allocation2 + $0x20] sm:$0xff] %v444
    %461 = vst [vmem:[#allocation2 + $0x28] sm:$0xff] %v445
    %462 = vst [vmem:[#allocation2 + $0x30] sm:$0xff] %v446
    %463 = vst [vmem:[#allocation2 + $0x38] sm:$0xff] %v447
    %464 = vst [vmem:[#allocation2 + $0x40] sm:$0xff] %v448
    %465 = vst [vmem:[#allocation2 + $0x48] sm:$0xff] %v449
    %466 = vst [vmem:[#allocation2 + $0x50] sm:$0xff] %v450
    %467 = vst [vmem:[#allocation2 + $0x58] sm:$0xff] %v451
    %468 = vst [vmem:[#allocation2 + $0x60] sm:$0xff] %v452
    %469 = vst [vmem:[#allocation2 + $0x68] sm:$0xff] %v453
    %470 = vst [vmem:[#allocation2 + $0x70] sm:$0xff] %v454
    %471 = vst [vmem:[#allocation2 + $0x78] sm:$0xff] %v455
    // Predicated region
    $region14: #{multi_kernel_conv.3} parent=1 // pred_check
      _
    $region15: #{multi_kernel_conv.3} parent=1 // pred_check_branch
      %473 = sbr.rel (0) target = $region17
    $region16: #{multi_kernel_conv.3} parent=1 // pred_region
      %s475 = ssub.s32 2048, 2048
      %476 = vsyncadd [#allocation3], %s475
      %s477 = sshll.u32 [#allocation2], 4
      %s478 = int_to_ptr.vmem [resolvable:$true] %s477
      %483 = dma.vmem_to_hbm [thread:$0]  %s478, 2048, %s3, [#allocation3], 128, 128, 8
    $region17: #{multi_kernel_conv.3} parent=1 // pred_fallthru
      _
    // Predicated region
    $region18: #{multi_kernel_conv.3} parent=1 // pred_check
      _
    $region19: #{multi_kernel_conv.3} parent=1 // pred_check_branch
      %485 = sbr.rel (0) target = $region21
    $region20: #{multi_kernel_conv.3} parent=1 // pred_region
      %486 = dma.done [#allocation3], 2048
    $region21: #{multi_kernel_conv.3} parent=1 // pred_fallthru
      _
    %487 = vsyncpa [#allocation3], 1

// kernel: multi_kernel_conv.2
$region0: #{multi_kernel_conv.2}
  #allocation0 [shape = 'u32[]', space=smem, size = 0x4, offset = 0x4, fixed_abs, tag = 'smem constant byte address 0x4 - core index']
  #allocation1 [shape = 'u32[144,128]{1,0:T(1,128)}', space=vmem, size = 0x12000, scoped, tag = 'internal scratch']
  %s0 = inlined_call_operand.vmem [shape: bf16[128,256], index: 0, kind: input, shape index: {}]
  %s1 = inlined_call_operand.vmem [shape: bf16[256,128], index: 1, kind: input, shape index: {}]
  %s2 = inlined_call_operand.vmem [shape: f32[1,128], index: 2, kind: input, shape index: {}]
  %s3 = inlined_call_operand.vmem [shape: bf16[128,128], index: 3, kind: output, shape index: {}]
  %s4 = sld [smem:[#allocation0]]
  $region22: #{multi_kernel_conv.2} parent=0
    _
  %s6 = ssub.s32 1, %s4
  %s7 = scalar_select 0, %s6, %s4
  // Predicated region
  $region2: #{multi_kernel_conv.2} parent=0 // pred_check
    _
  $region3: #{multi_kernel_conv.2} parent=0 // pred_check_branch
    %9 = sbr.rel (0) target = $region5
  $region4: #{multi_kernel_conv.2} parent=0 // pred_region
    _
  $region5: #{multi_kernel_conv.2} parent=0 // pred_fallthru
    _
  // Predicated region
  $region6: #{multi_kernel_conv.2} parent=0 // pred_check
    _
  $region7: #{multi_kernel_conv.2} parent=0 // pred_check_branch
    %11 = sbr.rel (0) target = $region9
  $region8: #{multi_kernel_conv.2} parent=0 // pred_region
    _
  $region9: #{multi_kernel_conv.2} parent=0 // pred_fallthru
    _
  // Predicated region
  $region10: #{multi_kernel_conv.2} parent=0 // pred_check
    _
  $region11: #{multi_kernel_conv.2} parent=0 // pred_check_branch
    %13 = sbr.rel (0) target = $region13
  $region12: #{multi_kernel_conv.2} parent=0 // pred_region
    _
  $region13: #{multi_kernel_conv.2} parent=0 // pred_fallthru
    _
  %v15 = vld [vmem:[%s0] sm:$0xff]
  %v16 = vld [vmem:[%s0 + $0x8] sm:$0xff]
  %v17 = vld [vmem:[%s0 + $0x10] sm:$0xff]
  %v18 = vld [vmem:[%s0 + $0x18] sm:$0xff]
  %v19 = vld [vmem:[%s0 + $0x20] sm:$0xff]
  %v20 = vld [vmem:[%s0 + $0x28] sm:$0xff]
  %v21 = vld [vmem:[%s0 + $0x30] sm:$0xff]
  %v22 = vld [vmem:[%s0 + $0x38] sm:$0xff]
  %v23 = vld [vmem:[%s0 + $0x40] sm:$0xff]
  %v24 = vld [vmem:[%s0 + $0x48] sm:$0xff]
  %v25 = vld [vmem:[%s0 + $0x50] sm:$0xff]
  %v26 = vld [vmem:[%s0 + $0x58] sm:$0xff]
  %v27 = vld [vmem:[%s0 + $0x60] sm:$0xff]
  %v28 = vld [vmem:[%s0 + $0x68] sm:$0xff]
  %v29 = vld [vmem:[%s0 + $0x70] sm:$0xff]
  %v30 = vld [vmem:[%s0 + $0x78] sm:$0xff]
  %v31 = vld [vmem:[%s1] sm:$0xf]
  %v32 = vld [vmem:[%s1 + $0x4] sm:$0xf]
  %v33 = vld [vmem:[%s1 + $0x8] sm:$0xf]
  %v34 = vld [vmem:[%s1 + $0xc] sm:$0xf]
  %v35 = vld [vmem:[%s1 + $0x10] sm:$0xf]
  %v36 = vld [vmem:[%s1 + $0x14] sm:$0xf]
  %v37 = vld [vmem:[%s1 + $0x18] sm:$0xf]
  %v38 = vld [vmem:[%s1 + $0x1c] sm:$0xf]
  %v39 = vld [vmem:[%s1 + $0x20] sm:$0xf]
  %v40 = vld [vmem:[%s1 + $0x24] sm:$0xf]
  %v41 = vld [vmem:[%s1 + $0x28] sm:$0xf]
  %v42 = vld [vmem:[%s1 + $0x2c] sm:$0xf]
  %v43 = vld [vmem:[%s1 + $0x30] sm:$0xf]
  %v44 = vld [vmem:[%s1 + $0x34] sm:$0xf]
  %v45 = vld [vmem:[%s1 + $0x38] sm:$0xf]
  %v46 = vld [vmem:[%s1 + $0x3c] sm:$0xf]
  %v47 = vld [vmem:[%s1 + $0x40] sm:$0xf]
  %v48 = vld [vmem:[%s1 + $0x44] sm:$0xf]
  %v49 = vld [vmem:[%s1 + $0x48] sm:$0xf]
  %v50 = vld [vmem:[%s1 + $0x4c] sm:$0xf]
  %v51 = vld [vmem:[%s1 + $0x50] sm:$0xf]
  %v52 = vld [vmem:[%s1 + $0x54] sm:$0xf]
  %v53 = vld [vmem:[%s1 + $0x58] sm:$0xf]
  %v54 = vld [vmem:[%s1 + $0x5c] sm:$0xf]
  %v55 = vld [vmem:[%s1 + $0x60] sm:$0xf]
  %v56 = vld [vmem:[%s1 + $0x64] sm:$0xf]
  %v57 = vld [vmem:[%s1 + $0x68] sm:$0xf]
  %v58 = vld [vmem:[%s1 + $0x6c] sm:$0xf]
  %v59 = vld [vmem:[%s1 + $0x70] sm:$0xf]
  %v60 = vld [vmem:[%s1 + $0x74] sm:$0xf]
  %v61 = vld [vmem:[%s1 + $0x78] sm:$0xf]
  %v62 = vld [vmem:[%s1 + $0x7c] sm:$0xf]
  %v63 = vld [vmem:[%s2] sm:$0x1]
  %v65 = vlaneseq
  %v66 = vshrl.u32 %v65, 7
  %v67 = vsub.s32 0, %v66
  %v68 = vrot.slane %v63, %v67
  %v86 = vunpack.c.l.b16 %v15
  %v87 = vunpack.c.h.b16 %v15
  %v88 = vunpack.c.l.b16 %v16
  %v89 = vunpack.c.h.b16 %v16
  %v90 = vunpack.c.l.b16 %v17
  %v91 = vunpack.c.h.b16 %v17
  %v92 = vunpack.c.l.b16 %v18
  %v93 = vunpack.c.h.b16 %v18
  %v94 = vunpack.c.l.b16 %v19
  %v95 = vunpack.c.h.b16 %v19
  %v96 = vunpack.c.l.b16 %v20
  %v97 = vunpack.c.h.b16 %v20
  %v98 = vunpack.c.l.b16 %v21
  %v99 = vunpack.c.h.b16 %v21
  %v100 = vunpack.c.l.b16 %v22
  %v101 = vunpack.c.h.b16 %v22
  %v102 = vunpack.c.l.b16 %v23
  %v103 = vunpack.c.h.b16 %v23
  %v104 = vunpack.c.l.b16 %v24
  %v105 = vunpack.c.h.b16 %v24
  %v106 = vunpack.c.l.b16 %v25
  %v107 = vunpack.c.h.b16 %v25
  %v108 = vunpack.c.l.b16 %v26
  %v109 = vunpack.c.h.b16 %v26
  %v110 = vunpack.c.l.b16 %v27
  %v111 = vunpack.c.h.b16 %v27
  %v112 = vunpack.c.l.b16 %v28
  %v113 = vunpack.c.h.b16 %v28
  %v114 = vunpack.c.l.b16 %v29
  %v115 = vunpack.c.h.b16 %v29
  %v116 = vunpack.c.l.b16 %v30
  %v117 = vunpack.c.h.b16 %v30
  %v118 = vpack.c.b16 %v88, %v86
  %v119 = vpack.c.b16 %v89, %v87
  %v120 = vpack.c.b16 %v92, %v90
  %v121 = vpack.c.b16 %v93, %v91
  %v122 = vpack.c.b16 %v96, %v94
  %v123 = vpack.c.b16 %v97, %v95
  %v124 = vpack.c.b16 %v100, %v98
  %v125 = vpack.c.b16 %v101, %v99
  %v126 = vpack.c.b16 %v104, %v102
  %v127 = vpack.c.b16 %v105, %v103
  %v128 = vpack.c.b16 %v108, %v106
  %v129 = vpack.c.b16 %v109, %v107
  %v130 = vpack.c.b16 %v112, %v110
  %v131 = vpack.c.b16 %v113, %v111
  %v132 = vpack.c.b16 %v116, %v114
  %v133 = vpack.c.b16 %v117, %v115
  %v182 = vunpack.c.l.b16 %v31
  %v183 = vunpack.c.l.b16 %v32
  %v184 = vunpack.c.l.b16 %v33
  %v185 = vunpack.c.l.b16 %v34
  %v186 = vunpack.c.l.b16 %v35
  %v187 = vunpack.c.l.b16 %v36
  %v188 = vunpack.c.l.b16 %v37
  %v189 = vunpack.c.l.b16 %v38
  %v190 = vunpack.c.l.b16 %v39
  %v191 = vunpack.c.l.b16 %v40
  %v192 = vunpack.c.l.b16 %v41
  %v193 = vunpack.c.l.b16 %v42
  %v194 = vunpack.c.l.b16 %v43
  %v195 = vunpack.c.l.b16 %v44
  %v196 = vunpack.c.l.b16 %v45
  %v197 = vunpack.c.l.b16 %v46
  %v198 = vunpack.c.l.b16 %v47
  %v199 = vunpack.c.l.b16 %v48
  %v200 = vunpack.c.l.b16 %v49
  %v201 = vunpack.c.l.b16 %v50
  %v202 = vunpack.c.l.b16 %v51
  %v203 = vunpack.c.l.b16 %v52
  %v204 = vunpack.c.l.b16 %v53
  %v205 = vunpack.c.l.b16 %v54
  %v206 = vunpack.c.l.b16 %v55
  %v207 = vunpack.c.l.b16 %v56
  %v208 = vunpack.c.l.b16 %v57
  %v209 = vunpack.c.l.b16 %v58
  %v210 = vunpack.c.l.b16 %v59
  %v211 = vunpack.c.l.b16 %v60
  %v212 = vunpack.c.l.b16 %v61
  %v213 = vunpack.c.l.b16 %v62
  %v214 = vpack.c.b16 %v183, %v182
  %v215 = vpack.c.b16 %v185, %v184
  %v216 = vpack.c.b16 %v187, %v186
  %v217 = vpack.c.b16 %v189, %v188
  %v218 = vpack.c.b16 %v191, %v190
  %v219 = vpack.c.b16 %v193, %v192
  %v220 = vpack.c.b16 %v195, %v194
  %v221 = vpack.c.b16 %v197, %v196
  %v222 = vpack.c.b16 %v199, %v198
  %v223 = vpack.c.b16 %v201, %v200
  %v224 = vpack.c.b16 %v203, %v202
  %v225 = vpack.c.b16 %v205, %v204
  %v226 = vpack.c.b16 %v207, %v206
  %v227 = vpack.c.b16 %v209, %v208
  %v228 = vpack.c.b16 %v211, %v210
  %v229 = vpack.c.b16 %v213, %v212
  %246 = vmatprep.subr.bf16.mxu0 0
  %247 = vmatpush1.bf16.msra.mxu0 %v214
  %248 = vmatprep.subr.bf16.mxu0 0
  %249 = vmatpush1.bf16.msra.mxu0 %v215
  %250 = vmatprep.subr.bf16.mxu0 0
  %251 = vmatpush1.bf16.msra.mxu0 %v216
  %252 = vmatprep.subr.bf16.mxu0 0
  %253 = vmatpush1.bf16.msra.mxu0 %v217
  %254 = vmatprep.subr.bf16.mxu0 0
  %255 = vmatpush1.bf16.msra.mxu0 %v218
  %256 = vmatprep.subr.bf16.mxu0 0
  %257 = vmatpush1.bf16.msra.mxu0 %v219
  %258 = vmatprep.subr.bf16.mxu0 0
  %259 = vmatpush1.bf16.msra.mxu0 %v220
  %260 = vmatprep.subr.bf16.mxu0 0
  %261 = vmatpush1.bf16.msra.mxu0 %v221
  %262 = vmatprep.subr.bf16.mxu0 0
  %263 = vmatpush1.bf16.msra.mxu0 %v222
  %264 = vmatprep.subr.bf16.mxu0 0
  %265 = vmatpush1.bf16.msra.mxu0 %v223
  %266 = vmatprep.subr.bf16.mxu0 0
  %267 = vmatpush1.bf16.msra.mxu0 %v224
  %268 = vmatprep.subr.bf16.mxu0 0
  %269 = vmatpush1.bf16.msra.mxu0 %v225
  %270 = vmatprep.subr.bf16.mxu0 0
  %271 = vmatpush1.bf16.msra.mxu0 %v226
  %272 = vmatprep.subr.bf16.mxu0 0
  %273 = vmatpush1.bf16.msra.mxu0 %v227
  %274 = vmatprep.subr.bf16.mxu0 0
  %275 = vmatpush1.bf16.msra.mxu0 %v228
  %276 = vmatprep.subr.bf16.mxu0 0
  %277 = vmatpush1.bf16.msra.mxu0 %v229
  %278 = vmatprep.mubr.bf16.mxu0 %v119
  %279 = vmatmul.mubr.bf16.gmra.mrb[0].mxu0 %v118
  %v280 = vpop.f32.mrb[0].mxu0
  %v281 = vadd.f32 %v68, %v280
  %v282 = vpop.f32.mrb[0].mxu0
  %v283 = vpop.f32.mrb[0].mxu0
  %v284 = vadd.f32 %v68, %v283
  %v285 = vpop.f32.mrb[0].mxu0
  %286 = vmatprep.mubr.bf16.mxu0 %v121
  %287 = vmatmul.mubr.bf16.gmra.mrb[0].mxu0 %v120
  %v288 = vpop.f32.mrb[0].mxu0
  %v289 = vadd.f32 %v68, %v288
  %v290 = vpop.f32.mrb[0].mxu0
  %v291 = vpop.f32.mrb[0].mxu0
  %v292 = vadd.f32 %v68, %v291
  %v293 = vpop.f32.mrb[0].mxu0
  %294 = vmatprep.mubr.bf16.mxu0 %v123
  %295 = vmatmul.mubr.bf16.gmra.mrb[0].mxu0 %v122
  %v296 = vpop.f32.mrb[0].mxu0
  %v297 = vadd.f32 %v68, %v296
  %v298 = vpop.f32.mrb[0].mxu0
  %v299 = vpop.f32.mrb[0].mxu0
  %v300 = vadd.f32 %v68, %v299
  %v301 = vpop.f32.mrb[0].mxu0
  %302 = vmatprep.mubr.bf16.mxu0 %v125
  %303 = vmatmul.mubr.bf16.gmra.mrb[0].mxu0 %v124
  %v304 = vpop.f32.mrb[0].mxu0
  %v305 = vadd.f32 %v68, %v304
  %v306 = vpop.f32.mrb[0].mxu0
  %v307 = vpop.f32.mrb[0].mxu0
  %v308 = vadd.f32 %v68, %v307
  %v309 = vpop.f32.mrb[0].mxu0
  %310 = vmatprep.mubr.bf16.mxu0 %v127
  %311 = vmatmul.mubr.bf16.gmra.mrb[0].mxu0 %v126
  %v312 = vpop.f32.mrb[0].mxu0
  %v313 = vadd.f32 %v68, %v312
  %v314 = vpop.f32.mrb[0].mxu0
  %v315 = vpop.f32.mrb[0].mxu0
  %v316 = vadd.f32 %v68, %v315
  %v317 = vpop.f32.mrb[0].mxu0
  %318 = vmatprep.mubr.bf16.mxu0 %v129
  %319 = vmatmul.mubr.bf16.gmra.mrb[0].mxu0 %v128
  %v320 = vpop.f32.mrb[0].mxu0
  %v321 = vadd.f32 %v68, %v320
  %v322 = vpop.f32.mrb[0].mxu0
  %v323 = vpop.f32.mrb[0].mxu0
  %v324 = vadd.f32 %v68, %v323
  %v325 = vpop.f32.mrb[0].mxu0
  %326 = vmatprep.mubr.bf16.mxu0 %v131
  %327 = vmatmul.mubr.bf16.gmra.mrb[0].mxu0 %v130
  %v328 = vpop.f32.mrb[0].mxu0
  %v329 = vadd.f32 %v68, %v328
  %v330 = vpop.f32.mrb[0].mxu0
  %v331 = vpop.f32.mrb[0].mxu0
  %v332 = vadd.f32 %v68, %v331
  %v333 = vpop.f32.mrb[0].mxu0
  %334 = vmatprep.mubr.bf16.mxu0 %v133
  %335 = vmatmul.mubr.bf16.gmra.mrb[0].mxu0 %v132
  %v336 = vpop.f32.mrb[0].mxu0
  %v337 = vadd.f32 %v68, %v336
  %v338 = vpop.f32.mrb[0].mxu0
  %v339 = vpop.f32.mrb[0].mxu0
  %v340 = vadd.f32 %v68, %v339
  %v341 = vpop.f32.mrb[0].mxu0
  %342 = vdwg.mxu0
  %v343 = vxor.u32 %v281, 2147483648
  %v344 = vxor.u32 %v284, 2147483648
  %v345 = vxor.u32 %v289, 2147483648
  %v346 = vxor.u32 %v292, 2147483648
  %v347 = vxor.u32 %v297, 2147483648
  %v348 = vxor.u32 %v300, 2147483648
  %v349 = vxor.u32 %v305, 2147483648
  %v350 = vxor.u32 %v308, 2147483648
  %v351 = vxor.u32 %v313, 2147483648
  %v352 = vxor.u32 %v316, 2147483648
  %v353 = vxor.u32 %v321, 2147483648
  %v354 = vxor.u32 %v324, 2147483648
  %v355 = vxor.u32 %v329, 2147483648
  %v356 = vxor.u32 %v332, 2147483648
  %v357 = vxor.u32 %v337, 2147483648
  %v358 = vxor.u32 %v340, 2147483648
  %v359 = vmul.f32 %v343, 1.442695
  %v360 = vpow.pop %v359
  %v361 = vmul.f32 %v344, 1.442695
  %v362 = vpow.pop %v361
  %v363 = vmul.f32 %v345, 1.442695
  %v364 = vpow.pop %v363
  %v365 = vmul.f32 %v346, 1.442695
  %v366 = vpow.pop %v365
  %v367 = vmul.f32 %v347, 1.442695
  %v368 = vpow.pop %v367
  %v369 = vmul.f32 %v348, 1.442695
  %v370 = vpow.pop %v369
  %v371 = vmul.f32 %v349, 1.442695
  %v372 = vpow.pop %v371
  %v373 = vmul.f32 %v350, 1.442695
  %v374 = vpow.pop %v373
  %v375 = vmul.f32 %v351, 1.442695
  %v376 = vpow.pop %v375
  %v377 = vmul.f32 %v352, 1.442695
  %v378 = vpow.pop %v377
  %v379 = vmul.f32 %v353, 1.442695
  %v380 = vpow.pop %v379
  %v381 = vmul.f32 %v354, 1.442695
  %v382 = vpow.pop %v381
  %v383 = vmul.f32 %v355, 1.442695
  %v384 = vpow.pop %v383
  %v385 = vmul.f32 %v356, 1.442695
  %v386 = vpow.pop %v385
  %v387 = vmul.f32 %v357, 1.442695
  %v388 = vpow.pop %v387
  %v389 = vmul.f32 %v358, 1.442695
  %v390 = vpow.pop %v389
  %v391 = vadd.f32 %v360, 1.0
  %v392 = vadd.f32 %v362, 1.0
  %v393 = vadd.f32 %v364, 1.0
  %v394 = vadd.f32 %v366, 1.0
  %v395 = vadd.f32 %v368, 1.0
  %v396 = vadd.f32 %v370, 1.0
  %v397 = vadd.f32 %v372, 1.0
  %v398 = vadd.f32 %v374, 1.0
  %v399 = vadd.f32 %v376, 1.0
  %v400 = vadd.f32 %v378, 1.0
  %v401 = vadd.f32 %v380, 1.0
  %v402 = vadd.f32 %v382, 1.0
  %v403 = vadd.f32 %v384, 1.0
  %v404 = vadd.f32 %v386, 1.0
  %v405 = vadd.f32 %v388, 1.0
  %v406 = vadd.f32 %v390, 1.0
  %v407 = vrcp.pop %v391
  %v408 = vmul.f32 1.0, %v407
  %v409 = vrcp.pop %v392
  %v410 = vmul.f32 1.0, %v409
  %v411 = vrcp.pop %v393
  %v412 = vmul.f32 1.0, %v411
  %v413 = vrcp.pop %v394
  %v414 = vmul.f32 1.0, %v413
  %v415 = vrcp.pop %v395
  %v416 = vmul.f32 1.0, %v415
  %v417 = vrcp.pop %v396
  %v418 = vmul.f32 1.0, %v417
  %v419 = vrcp.pop %v397
  %v420 = vmul.f32 1.0, %v419
  %v421 = vrcp.pop %v398
  %v422 = vmul.f32 1.0, %v421
  %v423 = vrcp.pop %v399
  %v424 = vmul.f32 1.0, %v423
  %v425 = vrcp.pop %v400
  %v426 = vmul.f32 1.0, %v425
  %v427 = vrcp.pop %v401
  %v428 = vmul.f32 1.0, %v427
  %v429 = vrcp.pop %v402
  %v430 = vmul.f32 1.0, %v429
  %v431 = vrcp.pop %v403
  %v432 = vmul.f32 1.0, %v431
  %v433 = vrcp.pop %v404
  %v434 = vmul.f32 1.0, %v433
  %v435 = vrcp.pop %v405
  %v436 = vmul.f32 1.0, %v435
  %v437 = vrcp.pop %v406
  %v438 = vmul.f32 1.0, %v437
  %v439 = vmul.f32 %v281, %v408
  %v440 = vmul.f32 %v284, %v410
  %v441 = vmul.f32 %v289, %v412
  %v442 = vmul.f32 %v292, %v414
  %v443 = vmul.f32 %v297, %v416
  %v444 = vmul.f32 %v300, %v418
  %v445 = vmul.f32 %v305, %v420
  %v446 = vmul.f32 %v308, %v422
  %v447 = vmul.f32 %v313, %v424
  %v448 = vmul.f32 %v316, %v426
  %v449 = vmul.f32 %v321, %v428
  %v450 = vmul.f32 %v324, %v430
  %v451 = vmul.f32 %v329, %v432
  %v452 = vmul.f32 %v332, %v434
  %v453 = vmul.f32 %v337, %v436
  %v454 = vmul.f32 %v340, %v438
  %v455 = vpack.c.bf16 %v440, %v439
  %v456 = vpack.c.bf16 %v442, %v441
  %v457 = vpack.c.bf16 %v444, %v443
  %v458 = vpack.c.bf16 %v446, %v445
  %v459 = vpack.c.bf16 %v448, %v447
  %v460 = vpack.c.bf16 %v450, %v449
  %v461 = vpack.c.bf16 %v452, %v451
  %v462 = vpack.c.bf16 %v454, %v453
  %v471 = vunpack.c.l.b16 %v455
  %v472 = vunpack.c.h.b16 %v455
  %v473 = vunpack.c.l.b16 %v456
  %v474 = vunpack.c.h.b16 %v456
  %v475 = vunpack.c.l.b16 %v457
  %v476 = vunpack.c.h.b16 %v457
  %v477 = vunpack.c.l.b16 %v458
  %v478 = vunpack.c.h.b16 %v458
  %v479 = vunpack.c.l.b16 %v459
  %v480 = vunpack.c.h.b16 %v459
  %v481 = vunpack.c.l.b16 %v460
  %v482 = vunpack.c.h.b16 %v460
  %v483 = vunpack.c.l.b16 %v461
  %v484 = vunpack.c.h.b16 %v461
  %v485 = vunpack.c.l.b16 %v462
  %v486 = vunpack.c.h.b16 %v462
  %v487 = vpack.c.b16 %v471, %v471
  %v488 = vpack.c.b16 %v472, %v472
  %v489 = vpack.c.b16 %v473, %v473
  %v490 = vpack.c.b16 %v474, %v474
  %v491 = vpack.c.b16 %v475, %v475
  %v492 = vpack.c.b16 %v476, %v476
  %v493 = vpack.c.b16 %v477, %v477
  %v494 = vpack.c.b16 %v478, %v478
  %v495 = vpack.c.b16 %v479, %v479
  %v496 = vpack.c.b16 %v480, %v480
  %v497 = vpack.c.b16 %v481, %v481
  %v498 = vpack.c.b16 %v482, %v482
  %v499 = vpack.c.b16 %v483, %v483
  %v500 = vpack.c.b16 %v484, %v484
  %v501 = vpack.c.b16 %v485, %v485
  %v502 = vpack.c.b16 %v486, %v486
  %519 = vst [vmem:[%s3] sm:$0xf] %v487
  %520 = vst [vmem:[%s3 + $0x4] sm:$0xf] %v488
  %521 = vst [vmem:[%s3 + $0x8] sm:$0xf] %v489
  %522 = vst [vmem:[%s3 + $0xc] sm:$0xf] %v490
  %523 = vst [vmem:[%s3 + $0x10] sm:$0xf] %v491
  %524 = vst [vmem:[%s3 + $0x14] sm:$0xf] %v492
  %525 = vst [vmem:[%s3 + $0x18] sm:$0xf] %v493
  %526 = vst [vmem:[%s3 + $0x1c] sm:$0xf] %v494
  %527 = vst [vmem:[%s3 + $0x20] sm:$0xf] %v495
  %528 = vst [vmem:[%s3 + $0x24] sm:$0xf] %v496
  %529 = vst [vmem:[%s3 + $0x28] sm:$0xf] %v497
  %530 = vst [vmem:[%s3 + $0x2c] sm:$0xf] %v498
  %531 = vst [vmem:[%s3 + $0x30] sm:$0xf] %v499
  %532 = vst [vmem:[%s3 + $0x34] sm:$0xf] %v500
  %533 = vst [vmem:[%s3 + $0x38] sm:$0xf] %v501
  %534 = vst [vmem:[%s3 + $0x3c] sm:$0xf] %v502
  // Predicated region
  $region14: #{multi_kernel_conv.2} parent=0 // pred_check
    _
  $region15: #{multi_kernel_conv.2} parent=0 // pred_check_branch
    %536 = sbr.rel (0) target = $region17
  $region16: #{multi_kernel_conv.2} parent=0 // pred_region
    _
  $region17: #{multi_kernel_conv.2} parent=0 // pred_fallthru
    _
  // Predicated region
  $region18: #{multi_kernel_conv.2} parent=0 // pred_check
    _
  $region19: #{multi_kernel_conv.2} parent=0 // pred_check_branch
    %538 = sbr.rel (0) target = $region21
  $region20: #{multi_kernel_conv.2} parent=0 // pred_region
    _
  $region21: #{multi_kernel_conv.2} parent=0 // pred_fallthru
    _

</llo_original>
